<compile_context>
chip_gen: v6e
topology: v6e:2x2x1
jax: 0.10.0
libtpu: 0.0.40
codegen_flags: <defaults>
</compile_context>

<pallas_src>
import functools
import math

import numpy as np
import jax
import jax.numpy as jnp
from jax import lax
from jax.experimental import pallas as pl
from jax.experimental.pallas import tpu as pltpu


LANES = 128          # lane-dense padded feature width for hidden layers
IMG = 8              # sklearn digits are 8x8, 1 channel
IN_FEAT = IMG * IMG  # 64 input features (kept un-padded: block last dim == full dim)


def _cdiv(a, b):
    return -(-a // b)


def _round_up(n, m):
    return _cdiv(n, m) * m


# --------------------------------------------------------------------------- #
# Parameter construction (deterministic, mirrors TinyQATCNN.__init__ spirit)
# --------------------------------------------------------------------------- #
def make_params(n_classes, n_bits, n_active, seed=0):
    rng = np.random.RandomState(seed)

    def quantize_weight(w, bits):
        qmax_w = 2 ** (bits - 1) - 1
        maxabs = max(float(np.max(np.abs(w))), 1e-8)
        scale = 2.0 ** np.ceil(np.log2(maxabs / qmax_w))     # power-of-two scale
        q = np.clip(np.round(w / scale), -qmax_w - 1, qmax_w)
        return (q * scale).astype(np.float32)

    def prune_l1(w):
        # replicate prune.l1_unstructured: zero the globally smallest-|w| entries
        cout = w.shape[0]
        per_neuron = int(np.prod(w.shape[1:]))
        if per_neuron <= n_active:
            return w
        n_prune = (per_neuron - n_active) * cout
        flat = w.reshape(-1).copy()
        flat[np.argsort(np.abs(flat))[:n_prune]] = 0.0
        return flat.reshape(w.shape)

    def make_conv(cout, cin, k, w_bits):
        fan_in = cin * k * k
        bound = 1.0 / np.sqrt(fan_in)
        w = rng.uniform(-bound, bound, size=(cout, cin, k, k)).astype(np.float32)
        b = rng.uniform(-bound, bound, size=(cout,)).astype(np.float32)
        return quantize_weight(prune_l1(w), w_bits), b

    w1, b1 = make_conv(2, 1, 3, n_bits)
    w2, b2 = make_conv(3, 2, 3, n_bits)
    w3, b3 = make_conv(16, 3, 2, n_bits)

    bound = 1.0 / np.sqrt(16)
    wfc = rng.uniform(-bound, bound, size=(n_classes, 16)).astype(np.float32)
    bfc = rng.uniform(-bound, bound, size=(n_classes,)).astype(np.float32)
    wfc = quantize_weight(wfc, 3)          # fc1 uses weight_bit_width=3
    return (w1, b1, w2, b2, w3, b3, wfc, bfc)


def calibrate_act_scales(x, params, n_bits, signed=True, narrow=False):
    """Deterministic power-of-two activation scales (emulates PoT act quant)."""
    qmax = (2 ** (n_bits - 1) - 1) if signed else (2 ** n_bits - 1)
    qmin = (-qmax if narrow else -(qmax + 1)) if signed else 0

    def pow2_scale(v):
        m = max(float(jnp.max(jnp.abs(v))), 1e-6)
        return float(2.0 ** np.ceil(np.log2(m / qmax)))

    def fq(v, s):
        return jnp.clip(jnp.floor(v / s + 0.5), qmin, qmax) * s

    w1, b1, w2, b2, w3, b3, _, _ = [jnp.asarray(p) for p in params]
    dn = ("NCHW", "OIHW", "NCHW")

    scales = []
    y = x
    s = pow2_scale(y); scales.append(s); y = fq(y, s)
    y = jnp.maximum(lax.conv_general_dilated(y, w1, (1, 1), "VALID",
                                             dimension_numbers=dn)
                    + b1[None, :, None, None], 0.0)
    s = pow2_scale(y); scales.append(s); y = fq(y, s)
    y = jnp.maximum(lax.conv_general_dilated(y, w2, (2, 2), "VALID",
                                             dimension_numbers=dn)
                    + b2[None, :, None, None], 0.0)
    s = pow2_scale(y); scales.append(s); y = fq(y, s)
    y = jnp.maximum(lax.conv_general_dilated(y, w3, (1, 1), "VALID",
                                             dimension_numbers=dn)
                    + b3[None, :, None, None], 0.0)
    s = pow2_scale(y); scales.append(s)
    return tuple(scales), float(qmin), float(qmax)


# --------------------------------------------------------------------------- #
# Host-side lowering: conv -> dense matmul, stacked/padded bf16 MXU operands
# --------------------------------------------------------------------------- #
def _conv_as_matmul(w, in_shape, stride):
    """Dense M such that flatten(conv_valid(x, w)) == flatten(x) @ M (NCHW)."""
    cout, cin, kh, kw = w.shape
    cin2, h, wd = in_shape
    assert cin == cin2
    oh = (h - kh) // stride + 1
    ow = (wd - kw) // stride + 1
    m = np.zeros((cin * h * wd, cout * oh * ow), np.float32)
    for co in range(cout):
        for oy in range(oh):
            for ox in range(ow):
                col = (co * oh + oy) * ow + ox
                for ci in range(cin):
                    for ky in range(kh):
                        for kx in range(kw):
                            row = (ci * h + oy * stride + ky) * wd + ox * stride + kx
                            m[row, col] = w[co, ci, ky, kx]
    return m, (cout, oh, ow)


def build_kernel_operands(params, act_scales):
    """Stack the 4 constant matrices into one (4,128,128) bf16 array and the
    4 biases into one (4,128) f32 array (2 pipelined operand windows, not 8)."""
    w1, b1, w2, b2, w3, b3, wfc, bfc = params
    m1, s1 = _conv_as_matmul(w1, (1, IMG, IMG), 1)   # (64, 72)
    m2, s2 = _conv_as_matmul(w2, s1, 2)              # (72, 12)
    m3, s3 = _conv_as_matmul(w3, s2, 1)              # (12, 16)
    mfc = wfc.T                                      # (16, n_classes)

    biases = [np.repeat(b1, s1[1] * s1[2]),
              np.repeat(b2, s2[1] * s2[2]),
              np.repeat(b3, s3[1] * s3[2]),
              bfc]

    # All quantizer scales must be exact powers of two: the kernel multiplies
    # by 1/s and folds s into the next constant matrix; non-pow2 would diverge
    # from the reference at bin boundaries.
    for s in act_scales:
        assert s > 0 and 2.0 ** round(math.log2(s)) == s, "activation scale not pow2"

    mats_np = np.zeros((4, LANES, LANES), np.float32)
    bias_np = np.zeros((4, LANES), np.float32)
    for i, (m, s) in enumerate(zip([m1, m2, m3, mfc], act_scales)):
        # Fold each activation-quantizer (pow2) scale into the constant matrix
        # that consumes it: the kernel feeds raw integer codes to the MXU.
        ms = (m * s).astype(np.float32)
        mats_np[i, : ms.shape[0], : ms.shape[1]] = ms
        bias_np[i, : biases[i].shape[0]] = biases[i]

    mats_bf16 = jnp.asarray(mats_np, dtype=jnp.bfloat16)
    # bf16-exactness guard (holds for n_bits<=8-ish; breaks silently otherwise).
    roundtrip = np.asarray(mats_bf16.astype(jnp.float32))
    assert np.array_equal(roundtrip, mats_np), "constant matrices are not bf16-exact"

    return mats_bf16, jnp.asarray(bias_np, dtype=jnp.float32)


# --------------------------------------------------------------------------- #
# Pallas kernel
# --------------------------------------------------------------------------- #
def _tiny_qat_cnn_kernel(x_ref, mats_ref, bias_ref, o_ref, *,
                         inv_scales, qmin, qmax, out_w):
    b_all = bias_ref[...]                                  # (4, 128) f32

    def linear(q, layer, k):
        m = mats_ref[layer]                                # (128, 128) bf16
        y = jnp.dot(q.astype(jnp.bfloat16), m[:k, :],
                    preferred_element_type=jnp.float32)
        return y + b_all[layer][None, :]

    x = x_ref[...]                                         # (TB, 64) f32

    # quant1: full signed range.
    q = jnp.clip(jnp.floor(x * inv_scales[0] + 0.5), qmin, qmax)
    y = linear(q, 0, IN_FEAT)                              # conv1

    # relu folded into the next quantizer's lower clip (inv_scale > 0, so
    # relu o quantize == clamping the integer code at 0).
    q = jnp.clip(jnp.floor(y * inv_scales[1] + 0.5), 0.0, qmax)   # relu+quant2
    y = linear(q, 1, LANES)                                # conv2

    q = jnp.clip(jnp.floor(y * inv_scales[2] + 0.5), 0.0, qmax)   # relu+quant3
    y = linear(q, 2, LANES)                                # conv3

    q = jnp.clip(jnp.floor(y * inv_scales[3] + 0.5), 0.0, qmax)   # relu+quant4
    y = linear(q, 3, LANES)                                # fc1

    o_ref[...] = y[:, :out_w]                              # narrow f32 writeback


def tiny_qat_cnn_forward(x, mats, biases, act_scales, qmin, qmax, n_classes,
                         *, batch_tile=2048):
    """x: (B, 1, 8, 8) f32 -> logits (B, n_classes) f32.

    NOTE: if batch_tile is raised past ~4096, also raise
    pltpu.CompilerParams(vmem_limit_bytes=...) to keep headroom for the f32
    intermediates + double-buffered x/out tiles.
    """
    B = x.shape[0]
    assert n_classes <= LANES
    # Integer activation codes must be bf16-exact.
    assert abs(qmin) <= 256 and qmax <= 256, "activation codes exceed bf16-exact range"

    out_w = min(LANES, max(8, _round_up(n_classes, 8)))    # 16 for n_classes<=16

    # Even batch split (don't pad e.g. 257 rows up to 512); for batches of
    # >= 512 rows force >= 2 grid steps so dimension_semantics=("parallel",)
    # can shard across v7x's two TensorCores (harmless on 1-TC v5e/v6e).
    n_tiles = _cdiv(B, batch_tile)
    if n_tiles == 1 and B >= 512:
        n_tiles = 2
    TB = _round_up(_cdiv(B, n_tiles), 8)                   # sublane-aligned tile
    B_pad = TB * n_tiles

    x_flat = x.reshape(B, IN_FEAT).astype(jnp.float32)     # NCHW flatten == torch .view order
    if B_pad != B:
        x_flat = jnp.pad(x_flat, ((0, B_pad - B), (0, 0)))  # batch pad only, no lane pad

    kernel = functools.partial(
        _tiny_qat_cnn_kernel,
        inv_scales=tuple(1.0 / float(s) for s in act_scales),
        qmin=float(qmin), qmax=float(qmax), out_w=out_w)

    out_pad = pl.pallas_call(
        kernel,
        out_shape=jax.ShapeDtypeStruct((B_pad, out_w), jnp.float32),
        grid=(n_tiles,),
        in_specs=[pl.BlockSpec((TB, IN_FEAT), lambda i: (i, 0)),
                  pl.BlockSpec((4, LANES, LANES), lambda i: (0, 0, 0)),
                  pl.BlockSpec((4, LANES), lambda i: (0, 0))],
        out_specs=pl.BlockSpec((TB, out_w), lambda i: (i, 0)),
        compiler_params=pltpu.CompilerParams(
            dimension_semantics=("parallel",)),
    )(x_flat, mats, biases)

    return out_pad[:B, :n_classes]


# --------------------------------------------------------------------------- #
# Pure-JAX reference (real convs + explicit ReLU, not the Toeplitz lowering)
# --------------------------------------------------------------------------- #
def _reference(x, params, act_scales, qmin, qmax):
    w1, b1, w2, b2, w3, b3, wfc, bfc = [jnp.asarray(p) for p in params]
    dn = ("NCHW", "OIHW", "NCHW")

    def fq(v, s):
        return jnp.clip(jnp.floor(v / s + 0.5), qmin, qmax) * s

    y = fq(x, act_scales[0])
    y = lax.conv_general_dilated(y, w1, (1, 1), "VALID", dimension_numbers=dn)
    y = jnp.maximum(y + b1[None, :, None, None], 0.0)
    y = fq(y, act_scales[1])
    y = lax.conv_general_dilated(y, w2, (2, 2), "VALID", dimension_numbers=dn)
    y = jnp.maximum(y + b2[None, :, None, None], 0.0)
    y = fq(y, act_scales[2])
    y = lax.conv_general_dilated(y, w3, (1, 1), "VALID", dimension_numbers=dn)
    y = jnp.maximum(y + b3[None, :, None, None], 0.0)
    y = fq(y, act_scales[3])
    y = y.reshape(-1, 16)
    return y @ wfc.T + bfc


if __name__ == "__main__":
    n_classes, n_bits, n_active = 10, 4, 4
    batch = 12   # not a multiple of 8 -> exercises the batch-pad path

    key = jax.random.PRNGKey(0)
    # digits-like inputs in [0, 16]
    x = jax.random.uniform(key, (batch, 1, IMG, IMG), jnp.float32,
                           minval=0.0, maxval=16.0)

    params = make_params(n_classes=n_classes, n_bits=n_bits,
                         n_active=n_active, seed=0)
    act_scales, qmin, qmax = calibrate_act_scales(x, params, n_bits,
                                                  signed=True, narrow=False)
    mats, biases = build_kernel_operands(params, act_scales)

    out = tiny_qat_cnn_forward(x, mats, biases, act_scales, qmin, qmax, n_classes)
    out = jax.block_until_ready(out)

    ref = _reference(x, params, act_scales, qmin, qmax)
    np.testing.assert_allclose(np.asarray(out), np.asarray(ref),
                               rtol=1e-4, atol=1e-4)

    print("KERNEL_OK")
</pallas_src>

<mosaic_0001>
module attributes {stable_mosaic.version = 11 : i64} {
  func.func @_tiny_qat_cnn_kernel(%arg0: i32, %arg1: memref<16x64xf32, #tpu.memory_space<vmem>>, %arg2: memref<4x128x128xbf16, #tpu.memory_space<vmem>>, %arg3: memref<4x128xf32, #tpu.memory_space<vmem>>, %arg4: memref<16x16xf32, #tpu.memory_space<vmem>>) attributes {dimension_semantics = [#tpu.dimension_semantics<parallel>], iteration_bounds = array<i64: 1>, scalar_prefetch = 0 : i64, scratch_operands = 0 : i64, tpu.core_type = #tpu.core_type<tc>, window_params = [{transform_indices = @transform_0, window_bounds = array<i64: 16, 64>}, {pipeline_mode = #tpu.pipeline_mode<synchronous>, transform_indices = @transform_1, window_bounds = array<i64: 4, 128, 128>}, {pipeline_mode = #tpu.pipeline_mode<synchronous>, transform_indices = @transform_2, window_bounds = array<i64: 4, 128>}, {transform_indices = @transform_3, window_bounds = array<i64: 16, 16>}]} {
    %c0 = arith.constant 0 : index
    %c0_0 = arith.constant 0 : index
    %0 = vector.load %arg3[%c0, %c0_0] : memref<4x128xf32, #tpu.memory_space<vmem>>, vector<4x128xf32>
    %c0_1 = arith.constant 0 : index
    %c0_2 = arith.constant 0 : index
    %1 = vector.load %arg1[%c0_1, %c0_2] : memref<16x64xf32, #tpu.memory_space<vmem>>, vector<16x64xf32>
    %cst = arith.constant 2.500000e-01 : f32
    %2 = vector.broadcast %cst : f32 to vector<16x64xf32>
    %3 = arith.mulf %1, %2 : vector<16x64xf32>
    %cst_3 = arith.constant 5.000000e-01 : f32
    %4 = vector.broadcast %cst_3 : f32 to vector<16x64xf32>
    %5 = arith.addf %3, %4 : vector<16x64xf32>
    %6 = math.floor %5 : vector<16x64xf32>
    %cst_4 = arith.constant -8.000000e+00 : f32
    %cst_5 = arith.constant 7.000000e+00 : f32
    %7 = vector.broadcast %cst_4 : f32 to vector<16x64xf32>
    %8 = arith.maximumf %7, %6 : vector<16x64xf32>
    %9 = vector.broadcast %cst_5 : f32 to vector<16x64xf32>
    %10 = arith.minimumf %9, %8 : vector<16x64xf32>
    %c0_6 = arith.constant 0 : index
    %c0_7 = arith.constant 0 : index
    %c0_8 = arith.constant 0 : index
    %11 = vector.load %arg2[%c0_6, %c0_7, %c0_8] : memref<4x128x128xbf16, #tpu.memory_space<vmem>>, vector<1x128x128xbf16>
    %12 = vector.shape_cast %11 : vector<1x128x128xbf16> to vector<128x128xbf16>
    %13 = arith.truncf %10 : vector<16x64xf32> to vector<16x64xbf16>
    %14 = vector.extract_strided_slice %12 {offsets = [0, 0], sizes = [64, 128], strides = [1, 1]} : vector<128x128xbf16> to vector<64x128xbf16>
    %cst_9 = arith.constant dense<0.000000e+00> : vector<16x128xf32>
    %15 = tpu.matmul %13, %14, %cst_9 {dimension_numbers = #tpu.dot_dimension_numbers<[1], [0], [0], [1], [0, 0, 1, 1], [], []>} : vector<16x64xbf16>, vector<64x128xbf16>, vector<16x128xf32> -> vector<16x128xf32>
    %16 = vector.extract_strided_slice %0 {offsets = [0, 0], sizes = [1, 128], strides = [1, 1]} : vector<4x128xf32> to vector<1x128xf32>
    %17 = vector.shape_cast %16 : vector<1x128xf32> to vector<128xf32>
    %18 = vector.shape_cast %17 : vector<128xf32> to vector<1x128xf32>
    %19 = vector.broadcast %18 : vector<1x128xf32> to vector<16x128xf32>
    %20 = arith.addf %15, %19 : vector<16x128xf32>
    %cst_10 = arith.constant 5.000000e-01 : f32
    %21 = vector.broadcast %cst_10 : f32 to vector<16x128xf32>
    %22 = arith.mulf %20, %21 : vector<16x128xf32>
    %cst_11 = arith.constant 5.000000e-01 : f32
    %23 = vector.broadcast %cst_11 : f32 to vector<16x128xf32>
    %24 = arith.addf %22, %23 : vector<16x128xf32>
    %25 = math.floor %24 : vector<16x128xf32>
    %cst_12 = arith.constant 0.000000e+00 : f32
    %cst_13 = arith.constant 7.000000e+00 : f32
    %26 = vector.broadcast %cst_12 : f32 to vector<16x128xf32>
    %27 = arith.maximumf %26, %25 : vector<16x128xf32>
    %28 = vector.broadcast %cst_13 : f32 to vector<16x128xf32>
    %29 = arith.minimumf %28, %27 : vector<16x128xf32>
    %c1 = arith.constant 1 : index
    %c0_14 = arith.constant 0 : index
    %c0_15 = arith.constant 0 : index
    %30 = vector.load %arg2[%c1, %c0_14, %c0_15] : memref<4x128x128xbf16, #tpu.memory_space<vmem>>, vector<1x128x128xbf16>
    %31 = vector.shape_cast %30 : vector<1x128x128xbf16> to vector<128x128xbf16>
    %32 = arith.truncf %29 : vector<16x128xf32> to vector<16x128xbf16>
    %cst_16 = arith.constant dense<0.000000e+00> : vector<16x128xf32>
    %33 = tpu.matmul %32, %31, %cst_16 {dimension_numbers = #tpu.dot_dimension_numbers<[1], [0], [0], [1], [0, 0, 1, 1], [], []>} : vector<16x128xbf16>, vector<128x128xbf16>, vector<16x128xf32> -> vector<16x128xf32>
    %34 = vector.extract_strided_slice %0 {offsets = [1, 0], sizes = [1, 128], strides = [1, 1]} : vector<4x128xf32> to vector<1x128xf32>
    %35 = vector.shape_cast %34 : vector<1x128xf32> to vector<128xf32>
    %36 = vector.shape_cast %35 : vector<128xf32> to vector<1x128xf32>
    %37 = vector.broadcast %36 : vector<1x128xf32> to vector<16x128xf32>
    %38 = arith.addf %33, %37 : vector<16x128xf32>
    %cst_17 = arith.constant 1.000000e+00 : f32
    %39 = vector.broadcast %cst_17 : f32 to vector<16x128xf32>
    %40 = arith.mulf %38, %39 : vector<16x128xf32>
    %cst_18 = arith.constant 5.000000e-01 : f32
    %41 = vector.broadcast %cst_18 : f32 to vector<16x128xf32>
    %42 = arith.addf %40, %41 : vector<16x128xf32>
    %43 = math.floor %42 : vector<16x128xf32>
    %cst_19 = arith.constant 0.000000e+00 : f32
    %cst_20 = arith.constant 7.000000e+00 : f32
    %44 = vector.broadcast %cst_19 : f32 to vector<16x128xf32>
    %45 = arith.maximumf %44, %43 : vector<16x128xf32>
    %46 = vector.broadcast %cst_20 : f32 to vector<16x128xf32>
    %47 = arith.minimumf %46, %45 : vector<16x128xf32>
    %c2 = arith.constant 2 : index
    %c0_21 = arith.constant 0 : index
    %c0_22 = arith.constant 0 : index
    %48 = vector.load %arg2[%c2, %c0_21, %c0_22] : memref<4x128x128xbf16, #tpu.memory_space<vmem>>, vector<1x128x128xbf16>
    %49 = vector.shape_cast %48 : vector<1x128x128xbf16> to vector<128x128xbf16>
    %50 = arith.truncf %47 : vector<16x128xf32> to vector<16x128xbf16>
    %cst_23 = arith.constant dense<0.000000e+00> : vector<16x128xf32>
    %51 = tpu.matmul %50, %49, %cst_23 {dimension_numbers = #tpu.dot_dimension_numbers<[1], [0], [0], [1], [0, 0, 1, 1], [], []>} : vector<16x128xbf16>, vector<128x128xbf16>, vector<16x128xf32> -> vector<16x128xf32>
    %52 = vector.extract_strided_slice %0 {offsets = [2, 0], sizes = [1, 128], strides = [1, 1]} : vector<4x128xf32> to vector<1x128xf32>
    %53 = vector.shape_cast %52 : vector<1x128xf32> to vector<128xf32>
    %54 = vector.shape_cast %53 : vector<128xf32> to vector<1x128xf32>
    %55 = vector.broadcast %54 : vector<1x128xf32> to vector<16x128xf32>
    %56 = arith.addf %51, %55 : vector<16x128xf32>
    %cst_24 = arith.constant 4.000000e+00 : f32
    %57 = vector.broadcast %cst_24 : f32 to vector<16x128xf32>
    %58 = arith.mulf %56, %57 : vector<16x128xf32>
    %cst_25 = arith.constant 5.000000e-01 : f32
    %59 = vector.broadcast %cst_25 : f32 to vector<16x128xf32>
    %60 = arith.addf %58, %59 : vector<16x128xf32>
    %61 = math.floor %60 : vector<16x128xf32>
    %cst_26 = arith.constant 0.000000e+00 : f32
    %cst_27 = arith.constant 7.000000e+00 : f32
    %62 = vector.broadcast %cst_26 : f32 to vector<16x128xf32>
    %63 = arith.maximumf %62, %61 : vector<16x128xf32>
    %64 = vector.broadcast %cst_27 : f32 to vector<16x128xf32>
    %65 = arith.minimumf %64, %63 : vector<16x128xf32>
    %c3 = arith.constant 3 : index
    %c0_28 = arith.constant 0 : index
    %c0_29 = arith.constant 0 : index
    %66 = vector.load %arg2[%c3, %c0_28, %c0_29] : memref<4x128x128xbf16, #tpu.memory_space<vmem>>, vector<1x128x128xbf16>
    %67 = vector.shape_cast %66 : vector<1x128x128xbf16> to vector<128x128xbf16>
    %68 = arith.truncf %65 : vector<16x128xf32> to vector<16x128xbf16>
    %cst_30 = arith.constant dense<0.000000e+00> : vector<16x128xf32>
    %69 = tpu.matmul %68, %67, %cst_30 {dimension_numbers = #tpu.dot_dimension_numbers<[1], [0], [0], [1], [0, 0, 1, 1], [], []>} : vector<16x128xbf16>, vector<128x128xbf16>, vector<16x128xf32> -> vector<16x128xf32>
    %70 = vector.extract_strided_slice %0 {offsets = [3, 0], sizes = [1, 128], strides = [1, 1]} : vector<4x128xf32> to vector<1x128xf32>
    %71 = vector.shape_cast %70 : vector<1x128xf32> to vector<128xf32>
    %72 = vector.shape_cast %71 : vector<128xf32> to vector<1x128xf32>
    %73 = vector.broadcast %72 : vector<1x128xf32> to vector<16x128xf32>
    %74 = arith.addf %69, %73 : vector<16x128xf32>
    %75 = vector.extract_strided_slice %74 {offsets = [0, 0], sizes = [16, 16], strides = [1, 1]} : vector<16x128xf32> to vector<16x16xf32>
    %c0_31 = arith.constant 0 : index
    %c0_32 = arith.constant 0 : index
    %76 = vector.load %arg4[%c0_31, %c0_32] : memref<16x16xf32, #tpu.memory_space<vmem>>, vector<16x16xf32>
    tpu.vector_store %arg4[%c0_31, %c0_32], %75 {strides = array<i32>} : memref<16x16xf32, #tpu.memory_space<vmem>>, vector<16x16xf32>,
    return
  }
  func.func @transform_0(%arg0: i32) -> (i32, i32) {
    %c0_i32 = arith.constant 0 : i32
    %c0_i32_0 = arith.constant 0 : i32
    return %arg0, %c0_i32 : i32, i32
  }
  func.func @transform_1(%arg0: i32) -> (i32, i32, i32) {
    %c0_i32 = arith.constant 0 : i32
    %c0_i32_0 = arith.constant 0 : i32
    %c0_i32_1 = arith.constant 0 : i32
    %c0_i32_2 = arith.constant 0 : i32
    return %c0_i32, %c0_i32_0, %c0_i32_1 : i32, i32, i32
  }
  func.func @transform_2(%arg0: i32) -> (i32, i32) {
    %c0_i32 = arith.constant 0 : i32
    %c0_i32_0 = arith.constant 0 : i32
    %c0_i32_1 = arith.constant 0 : i32
    return %c0_i32, %c0_i32_0 : i32, i32
  }
  func.func @transform_3(%arg0: i32) -> (i32, i32) {
    %c0_i32 = arith.constant 0 : i32
    %c0_i32_0 = arith.constant 0 : i32
    return %arg0, %c0_i32 : i32, i32
  }
}

</mosaic_0001>

<llo_original>
// kernel: tpu_custom_call.1
$region0: #{tpu_custom_call.1}
  #allocation0 [shape = 'u32[]', space=smem, size = 0x4, offset = 0x4, fixed_abs, tag = 'smem constant byte address 0x4 - core index']
  #allocation1 [shape = 'u32[144,128]{1,0:T(1,128)}', space=vmem, size = 0x12000, scoped, tag = 'internal scratch']
  %s0 = inlined_call_operand.hbm [shape: f32[16,64], index: 0, kind: input, shape index: {}]
  %s1 = inlined_call_operand.hbm [shape: bf16[4,128,128], index: 1, kind: input, shape index: {}]
  %s2 = inlined_call_operand.hbm [shape: f32[4,128], index: 2, kind: input, shape index: {}]
  %s3 = inlined_call_operand.hbm [shape: f32[16,16], index: 3, kind: output, shape index: {}]
  %s4 = sld [smem:[#allocation0]]
  $region34: #{tpu_custom_call.1} parent=0
    _
  %s6 = ssub.s32 1, %s4
  %s7 = scalar_select 0, %s6, %s4
  $region1: #{tpu_custom_call.1} parent=0
    #allocation2 [shape = 'u8[8192]{0}', space=vmem, size = 0x2000, scoped, tag = 'input window, operand 0, single buffered']
    #allocation3 [shape = 's32[1]{0}', space=sflag, size = 0x4, scoped, tag = 'scoped memory for tpu_custom_call.1']
    #allocation4 [shape = 's32[1]{0}', space=sflag, size = 0x4, scoped, tag = 'scoped memory for tpu_custom_call.1']
    #allocation5 [shape = 'u8[131072]{0}', space=vmem, size = 0x20000, scoped, tag = 'input window, operand 1, single buffered']
    #allocation6 [shape = 's32[1]{0}', space=sflag, size = 0x4, scoped, tag = 'scoped memory for tpu_custom_call.1']
    #allocation7 [shape = 'u8[2048]{0}', space=vmem, size = 0x800, scoped, tag = 'input window, operand 2, single buffered']
    #allocation8 [shape = 'u8[8192]{0}', space=vmem, size = 0x2000, scoped, tag = 'output window, operand 0, single buffered']
    %8 = vsyncpa [#allocation3], 0
    %9 = vsyncpa [#allocation6], 0
    %10 = vsyncpa [#allocation4], 0
    // Predicated region
    $region2: #{tpu_custom_call.1} parent=1 // pred_check
      _
    $region3: #{tpu_custom_call.1} parent=1 // pred_check_branch
      %12 = sbr.rel (0) target = $region5
    $region4: #{tpu_custom_call.1} parent=1 // pred_region
      %s14 = ssub.s32 256, 256
      %15 = vsyncadd [#allocation3], %s14
      %s16 = sshll.u32 [#allocation2], 4
      %s17 = int_to_ptr.vmem [resolvable:$true] %s16
      %22 = dma.hbm_to_vmem [thread:$0]  %s0, 256, %s17, [#allocation3], 128, 128, 8
    $region5: #{tpu_custom_call.1} parent=1 // pred_fallthru
      _
    // Predicated region
    $region6: #{tpu_custom_call.1} parent=1 // pred_check
      _
    $region7: #{tpu_custom_call.1} parent=1 // pred_check_branch
      %24 = sbr.rel (0) target = $region9
    $region8: #{tpu_custom_call.1} parent=1 // pred_region
      %s26 = ssub.s32 4096, 4096
      %27 = vsyncadd [#allocation6], %s26
      %s28 = sshll.u32 [#allocation5], 4
      %s29 = int_to_ptr.vmem [resolvable:$true] %s28
      %34 = dma.hbm_to_vmem [thread:$0]  %s1, 4096, %s29, [#allocation6], 64, 64, 4
    $region9: #{tpu_custom_call.1} parent=1 // pred_fallthru
      _
    // Predicated region
    $region10: #{tpu_custom_call.1} parent=1 // pred_check
      _
    $region11: #{tpu_custom_call.1} parent=1 // pred_check_branch
      %36 = sbr.rel (0) target = $region13
    $region12: #{tpu_custom_call.1} parent=1 // pred_region
      %s38 = ssub.s32 64, 64
      %39 = vsyncadd [#allocation6], %s38
      %s41 = sshll.u32 [#allocation7], 4
      %s42 = int_to_ptr.vmem [resolvable:$true] %s41
      %44 = dma.hbm_to_vmem [thread:$0]  %s2, 64, %s42, [#allocation6]
    $region13: #{tpu_custom_call.1} parent=1 // pred_fallthru
      _
    // Predicated region
    $region14: #{tpu_custom_call.1} parent=1 // pred_check
      _
    $region15: #{tpu_custom_call.1} parent=1 // pred_check_branch
      %46 = sbr.rel (0) target = $region17
    $region16: #{tpu_custom_call.1} parent=1 // pred_region
      %47 = dma.done [#allocation3], 256
    $region17: #{tpu_custom_call.1} parent=1 // pred_fallthru
      _
    // Predicated region
    $region18: #{tpu_custom_call.1} parent=1 // pred_check
      _
    $region19: #{tpu_custom_call.1} parent=1 // pred_check_branch
      %49 = sbr.rel (0) target = $region21
    $region20: #{tpu_custom_call.1} parent=1 // pred_region
      %50 = dma.done [#allocation6], 4096
    $region21: #{tpu_custom_call.1} parent=1 // pred_fallthru
      _
    // Predicated region
    $region22: #{tpu_custom_call.1} parent=1 // pred_check
      _
    $region23: #{tpu_custom_call.1} parent=1 // pred_check_branch
      %52 = sbr.rel (0) target = $region25
    $region24: #{tpu_custom_call.1} parent=1 // pred_region
      %53 = dma.done [#allocation6], 64
    $region25: #{tpu_custom_call.1} parent=1 // pred_fallthru
      _
    %v55 = vld [vmem:[#allocation7] sm:$0xf]
    %v56 = vld [vmem:[#allocation2] sm:$0xff]
    %v57 = vld [vmem:[#allocation2 + $0x8] sm:$0xff]
    %v58 = vmul.f32 %v56, 0.25
    %v59 = vmul.f32 %v57, 0.25
    %v60 = vadd.f32 %v58, 0.5
    %v61 = vadd.f32 %v59, 0.5
    %v62 = vfloor.f32 %v60
    %v63 = vfloor.f32 %v61
    %v64 = vmax.f32 %v62, -8.0
    %v65 = vmax.f32 %v63, -8.0
    %v66 = vmin.f32 %v64, 7.0
    %v67 = vmin.f32 %v65, 7.0
    %v68 = vld [vmem:[#allocation5] sm:$0xf]
    %v69 = vld [vmem:[#allocation5 + $0x4] sm:$0xf]
    %v70 = vld [vmem:[#allocation5 + $0x8] sm:$0xf]
    %v71 = vld [vmem:[#allocation5 + $0xc] sm:$0xf]
    %v72 = vld [vmem:[#allocation5 + $0x10] sm:$0xf]
    %v73 = vld [vmem:[#allocation5 + $0x14] sm:$0xf]
    %v74 = vld [vmem:[#allocation5 + $0x18] sm:$0xf]
    %v75 = vld [vmem:[#allocation5 + $0x1c] sm:$0xf]
    %v76 = vpack.c.bf16 %v67, %v66
    %v77 = vlaneseq
    %v78 = vshrl.u32 %v77, 7
    %v79 = vsub.s32 0, %v78
    %v80 = vrot.slane %v55, %v79
    %v89 = vunpack.c.l.b16 %v68
    %v90 = vunpack.c.l.b16 %v69
    %v91 = vunpack.c.l.b16 %v70
    %v92 = vunpack.c.l.b16 %v71
    %v93 = vunpack.c.l.b16 %v72
    %v94 = vunpack.c.l.b16 %v73
    %v95 = vunpack.c.l.b16 %v74
    %v96 = vunpack.c.l.b16 %v75
    %v97 = vpack.c.b16 %v90, %v89
    %v98 = vpack.c.b16 %v92, %v91
    %v99 = vpack.c.b16 %v94, %v93
    %v100 = vpack.c.b16 %v96, %v95
    %vm105 = vcmask 523264
    %v107 = vsel %vm105, %v76, 0
    %109 = vmatprep.subr.bf16.mxu0 0
    %110 = vmatpush1.bf16.msra.mxu0 0
    %111 = vmatprep.subr.bf16.mxu0 0
    %112 = vmatpush1.bf16.msra.mxu0 0
    %113 = vmatprep.subr.bf16.mxu0 0
    %114 = vmatpush1.bf16.msra.mxu0 0
    %115 = vmatprep.subr.bf16.mxu0 0
    %116 = vmatpush1.bf16.msra.mxu0 0
    %117 = vmatprep.subr.bf16.mxu0 0
    %118 = vmatpush1.bf16.msra.mxu0 %v100
    %119 = vmatprep.subr.bf16.mxu0 0
    %120 = vmatpush1.bf16.msra.mxu0 %v99
    %121 = vmatprep.subr.bf16.mxu0 0
    %122 = vmatpush1.bf16.msra.mxu0 %v98
    %123 = vmatprep.subr.bf16.mxu0 0
    %124 = vmatpush1.bf16.msra.mxu0 %v97
    %125 = vmatprep.subr.bf16.mxu0 0
    %126 = vmatpush2.bf16.msra.mxu0 0
    %127 = vmatprep.subr.bf16.mxu0 0
    %128 = vmatpush2.bf16.msra.mxu0 0
    %129 = vmatprep.subr.bf16.mxu0 0
    %130 = vmatpush2.bf16.msra.mxu0 0
    %131 = vmatprep.subr.bf16.mxu0 0
    %132 = vmatpush2.bf16.msra.mxu0 0
    %133 = vmatprep.subr.bf16.mxu0 0
    %134 = vmatpush2.bf16.msra.mxu0 0
    %135 = vmatprep.subr.bf16.mxu0 0
    %136 = vmatpush2.bf16.msra.mxu0 0
    %137 = vmatprep.subr.bf16.mxu0 0
    %138 = vmatpush2.bf16.msra.mxu0 0
    %139 = vmatprep.subr.bf16.mxu0 0
    %140 = vmatpush2.bf16.msra.mxu0 0
    %141 = vmatprep.mubr.bf16.mxu0 0
    %142 = vmatmul.mubr.bf16.gmra.mxu0 %v107
    %v143 = vpop.f32.mrf.mxu0
    %v144 = vadd.f32 %v80, %v143
    %v145 = vpop.f32.mrf.mxu0
    %v146 = vpop.f32.mrf.mxu0
    %v147 = vadd.f32 %v80, %v146
    %v148 = vpop.f32.mrf.mxu0
    %149 = vdwg.mxu0
    %v150 = vmul.f32 %v144, 0.5
    %v151 = vmul.f32 %v147, 0.5
    %v152 = vadd.f32 %v150, 0.5
    %v153 = vadd.f32 %v151, 0.5
    %v154 = vfloor.f32 %v152
    %v155 = vfloor.f32 %v153
    %v156 = vmax.f32 %v154, 0.0
    %v157 = vmax.f32 %v155, 0.0
    %v158 = vmin.f32 %v156, 7.0
    %v159 = vmin.f32 %v157, 7.0
    %s160 = scalar_lea.vmem [#allocation5], 64
    %v161 = vld [vmem:[%s160] sm:$0xf]
    %v162 = vld [vmem:[%s160 + $0x4] sm:$0xf]
    %v163 = vld [vmem:[%s160 + $0x8] sm:$0xf]
    %v164 = vld [vmem:[%s160 + $0xc] sm:$0xf]
    %v165 = vld [vmem:[%s160 + $0x10] sm:$0xf]
    %v166 = vld [vmem:[%s160 + $0x14] sm:$0xf]
    %v167 = vld [vmem:[%s160 + $0x18] sm:$0xf]
    %v168 = vld [vmem:[%s160 + $0x1c] sm:$0xf]
    %v169 = vld [vmem:[%s160 + $0x20] sm:$0xf]
    %v170 = vld [vmem:[%s160 + $0x24] sm:$0xf]
    %v171 = vld [vmem:[%s160 + $0x28] sm:$0xf]
    %v172 = vld [vmem:[%s160 + $0x2c] sm:$0xf]
    %v173 = vld [vmem:[%s160 + $0x30] sm:$0xf]
    %v174 = vld [vmem:[%s160 + $0x34] sm:$0xf]
    %v175 = vld [vmem:[%s160 + $0x38] sm:$0xf]
    %v176 = vld [vmem:[%s160 + $0x3c] sm:$0xf]
    %v177 = vpack.c.bf16 %v159, %v158
    %v178 = vlaneseq
    %v179 = vshrl.u32 %v178, 7
    %v180 = vsub.s32 1, %v179
    %v181 = vrot.slane %v55, %v180
    %v198 = vunpack.c.l.b16 %v161
    %v199 = vunpack.c.l.b16 %v162
    %v200 = vunpack.c.l.b16 %v163
    %v201 = vunpack.c.l.b16 %v164
    %v202 = vunpack.c.l.b16 %v165
    %v203 = vunpack.c.l.b16 %v166
    %v204 = vunpack.c.l.b16 %v167
    %v205 = vunpack.c.l.b16 %v168
    %v206 = vunpack.c.l.b16 %v169
    %v207 = vunpack.c.l.b16 %v170
    %v208 = vunpack.c.l.b16 %v171
    %v209 = vunpack.c.l.b16 %v172
    %v210 = vunpack.c.l.b16 %v173
    %v211 = vunpack.c.l.b16 %v174
    %v212 = vunpack.c.l.b16 %v175
    %v213 = vunpack.c.l.b16 %v176
    %v214 = vpack.c.b16 %v199, %v198
    %v215 = vpack.c.b16 %v201, %v200
    %v216 = vpack.c.b16 %v203, %v202
    %v217 = vpack.c.b16 %v205, %v204
    %v218 = vpack.c.b16 %v207, %v206
    %v219 = vpack.c.b16 %v209, %v208
    %v220 = vpack.c.b16 %v211, %v210
    %v221 = vpack.c.b16 %v213, %v212
    %230 = vmatprep.subr.bf16.mxu0 0
    %231 = vmatpush1.bf16.msra.mxu0 %v221
    %232 = vmatprep.subr.bf16.mxu0 0
    %233 = vmatpush1.bf16.msra.mxu0 %v220
    %234 = vmatprep.subr.bf16.mxu0 0
    %235 = vmatpush1.bf16.msra.mxu0 %v219
    %236 = vmatprep.subr.bf16.mxu0 0
    %237 = vmatpush1.bf16.msra.mxu0 %v218
    %238 = vmatprep.subr.bf16.mxu0 0
    %239 = vmatpush1.bf16.msra.mxu0 %v217
    %240 = vmatprep.subr.bf16.mxu0 0
    %241 = vmatpush1.bf16.msra.mxu0 %v216
    %242 = vmatprep.subr.bf16.mxu0 0
    %243 = vmatpush1.bf16.msra.mxu0 %v215
    %244 = vmatprep.subr.bf16.mxu0 0
    %245 = vmatpush1.bf16.msra.mxu0 %v214
    %246 = vmatprep.subr.bf16.mxu0 0
    %247 = vmatpush2.bf16.msra.mxu0 0
    %248 = vmatprep.subr.bf16.mxu0 0
    %249 = vmatpush2.bf16.msra.mxu0 0
    %250 = vmatprep.subr.bf16.mxu0 0
    %251 = vmatpush2.bf16.msra.mxu0 0
    %252 = vmatprep.subr.bf16.mxu0 0
    %253 = vmatpush2.bf16.msra.mxu0 0
    %254 = vmatprep.subr.bf16.mxu0 0
    %255 = vmatpush2.bf16.msra.mxu0 0
    %256 = vmatprep.subr.bf16.mxu0 0
    %257 = vmatpush2.bf16.msra.mxu0 0
    %258 = vmatprep.subr.bf16.mxu0 0
    %259 = vmatpush2.bf16.msra.mxu0 0
    %260 = vmatprep.subr.bf16.mxu0 0
    %261 = vmatpush2.bf16.msra.mxu0 0
    %262 = vmatprep.mubr.bf16.mxu0 0
    %263 = vmatmul.mubr.bf16.gmra.mxu0 %v177
    %v264 = vpop.f32.mrf.mxu0
    %v265 = vadd.f32 %v181, %v264
    %v266 = vpop.f32.mrf.mxu0
    %v267 = vpop.f32.mrf.mxu0
    %v268 = vadd.f32 %v181, %v267
    %v269 = vpop.f32.mrf.mxu0
    %270 = vdwg.mxu0
    %v271 = vadd.f32 %v265, 0.5
    %v272 = vadd.f32 %v268, 0.5
    %v273 = vfloor.f32 %v271
    %v274 = vfloor.f32 %v272
    %v275 = vmax.f32 %v273, 0.0
    %v276 = vmax.f32 %v274, 0.0
    %v277 = vmin.f32 %v275, 7.0
    %v278 = vmin.f32 %v276, 7.0
    %s279 = scalar_lea.vmem [#allocation5], 128
    %v280 = vld [vmem:[%s279] sm:$0xf]
    %v281 = vld [vmem:[%s279 + $0x4] sm:$0xf]
    %v282 = vld [vmem:[%s279 + $0x8] sm:$0xf]
    %v283 = vld [vmem:[%s279 + $0xc] sm:$0xf]
    %v284 = vld [vmem:[%s279 + $0x10] sm:$0xf]
    %v285 = vld [vmem:[%s279 + $0x14] sm:$0xf]
    %v286 = vld [vmem:[%s279 + $0x18] sm:$0xf]
    %v287 = vld [vmem:[%s279 + $0x1c] sm:$0xf]
    %v288 = vld [vmem:[%s279 + $0x20] sm:$0xf]
    %v289 = vld [vmem:[%s279 + $0x24] sm:$0xf]
    %v290 = vld [vmem:[%s279 + $0x28] sm:$0xf]
    %v291 = vld [vmem:[%s279 + $0x2c] sm:$0xf]
    %v292 = vld [vmem:[%s279 + $0x30] sm:$0xf]
    %v293 = vld [vmem:[%s279 + $0x34] sm:$0xf]
    %v294 = vld [vmem:[%s279 + $0x38] sm:$0xf]
    %v295 = vld [vmem:[%s279 + $0x3c] sm:$0xf]
    %v296 = vpack.c.bf16 %v278, %v277
    %v297 = vlaneseq
    %v298 = vshrl.u32 %v297, 7
    %v299 = vsub.s32 2, %v298
    %v300 = vrot.slane %v55, %v299
    %v317 = vunpack.c.l.b16 %v280
    %v318 = vunpack.c.l.b16 %v281
    %v319 = vunpack.c.l.b16 %v282
    %v320 = vunpack.c.l.b16 %v283
    %v321 = vunpack.c.l.b16 %v284
    %v322 = vunpack.c.l.b16 %v285
    %v323 = vunpack.c.l.b16 %v286
    %v324 = vunpack.c.l.b16 %v287
    %v325 = vunpack.c.l.b16 %v288
    %v326 = vunpack.c.l.b16 %v289
    %v327 = vunpack.c.l.b16 %v290
    %v328 = vunpack.c.l.b16 %v291
    %v329 = vunpack.c.l.b16 %v292
    %v330 = vunpack.c.l.b16 %v293
    %v331 = vunpack.c.l.b16 %v294
    %v332 = vunpack.c.l.b16 %v295
    %v333 = vpack.c.b16 %v318, %v317
    %v334 = vpack.c.b16 %v320, %v319
    %v335 = vpack.c.b16 %v322, %v321
    %v336 = vpack.c.b16 %v324, %v323
    %v337 = vpack.c.b16 %v326, %v325
    %v338 = vpack.c.b16 %v328, %v327
    %v339 = vpack.c.b16 %v330, %v329
    %v340 = vpack.c.b16 %v332, %v331
    %349 = vmatprep.subr.bf16.mxu0 0
    %350 = vmatpush1.bf16.msra.mxu0 %v340
    %351 = vmatprep.subr.bf16.mxu0 0
    %352 = vmatpush1.bf16.msra.mxu0 %v339
    %353 = vmatprep.subr.bf16.mxu0 0
    %354 = vmatpush1.bf16.msra.mxu0 %v338
    %355 = vmatprep.subr.bf16.mxu0 0
    %356 = vmatpush1.bf16.msra.mxu0 %v337
    %357 = vmatprep.subr.bf16.mxu0 0
    %358 = vmatpush1.bf16.msra.mxu0 %v336
    %359 = vmatprep.subr.bf16.mxu0 0
    %360 = vmatpush1.bf16.msra.mxu0 %v335
    %361 = vmatprep.subr.bf16.mxu0 0
    %362 = vmatpush1.bf16.msra.mxu0 %v334
    %363 = vmatprep.subr.bf16.mxu0 0
    %364 = vmatpush1.bf16.msra.mxu0 %v333
    %365 = vmatprep.subr.bf16.mxu0 0
    %366 = vmatpush2.bf16.msra.mxu0 0
    %367 = vmatprep.subr.bf16.mxu0 0
    %368 = vmatpush2.bf16.msra.mxu0 0
    %369 = vmatprep.subr.bf16.mxu0 0
    %370 = vmatpush2.bf16.msra.mxu0 0
    %371 = vmatprep.subr.bf16.mxu0 0
    %372 = vmatpush2.bf16.msra.mxu0 0
    %373 = vmatprep.subr.bf16.mxu0 0
    %374 = vmatpush2.bf16.msra.mxu0 0
    %375 = vmatprep.subr.bf16.mxu0 0
    %376 = vmatpush2.bf16.msra.mxu0 0
    %377 = vmatprep.subr.bf16.mxu0 0
    %378 = vmatpush2.bf16.msra.mxu0 0
    %379 = vmatprep.subr.bf16.mxu0 0
    %380 = vmatpush2.bf16.msra.mxu0 0
    %381 = vmatprep.mubr.bf16.mxu0 0
    %382 = vmatmul.mubr.bf16.gmra.mxu0 %v296
    %v383 = vpop.f32.mrf.mxu0
    %v384 = vadd.f32 %v300, %v383
    %v385 = vpop.f32.mrf.mxu0
    %v386 = vpop.f32.mrf.mxu0
    %v387 = vadd.f32 %v300, %v386
    %v388 = vpop.f32.mrf.mxu0
    %389 = vdwg.mxu0
    %v390 = vmul.f32 %v384, 4.0
    %v391 = vmul.f32 %v387, 4.0
    %v392 = vadd.f32 %v390, 0.5
    %v393 = vadd.f32 %v391, 0.5
    %v394 = vfloor.f32 %v392
    %v395 = vfloor.f32 %v393
    %v396 = vmax.f32 %v394, 0.0
    %v397 = vmax.f32 %v395, 0.0
    %v398 = vmin.f32 %v396, 7.0
    %v399 = vmin.f32 %v397, 7.0
    %s400 = scalar_lea.vmem [#allocation5], 192
    %v401 = vld [vmem:[%s400] sm:$0xf]
    %v402 = vld [vmem:[%s400 + $0x4] sm:$0xf]
    %v403 = vld [vmem:[%s400 + $0x8] sm:$0xf]
    %v404 = vld [vmem:[%s400 + $0xc] sm:$0xf]
    %v405 = vld [vmem:[%s400 + $0x10] sm:$0xf]
    %v406 = vld [vmem:[%s400 + $0x14] sm:$0xf]
    %v407 = vld [vmem:[%s400 + $0x18] sm:$0xf]
    %v408 = vld [vmem:[%s400 + $0x1c] sm:$0xf]
    %v409 = vld [vmem:[%s400 + $0x20] sm:$0xf]
    %v410 = vld [vmem:[%s400 + $0x24] sm:$0xf]
    %v411 = vld [vmem:[%s400 + $0x28] sm:$0xf]
    %v412 = vld [vmem:[%s400 + $0x2c] sm:$0xf]
    %v413 = vld [vmem:[%s400 + $0x30] sm:$0xf]
    %v414 = vld [vmem:[%s400 + $0x34] sm:$0xf]
    %v415 = vld [vmem:[%s400 + $0x38] sm:$0xf]
    %v416 = vld [vmem:[%s400 + $0x3c] sm:$0xf]
    %v417 = vpack.c.bf16 %v399, %v398
    %v418 = vlaneseq
    %v419 = vshrl.u32 %v418, 7
    %v420 = vsub.s32 3, %v419
    %v421 = vrot.slane %v55, %v420
    %v438 = vunpack.c.l.b16 %v401
    %v439 = vunpack.c.l.b16 %v402
    %v440 = vunpack.c.l.b16 %v403
    %v441 = vunpack.c.l.b16 %v404
    %v442 = vunpack.c.l.b16 %v405
    %v443 = vunpack.c.l.b16 %v406
    %v444 = vunpack.c.l.b16 %v407
    %v445 = vunpack.c.l.b16 %v408
    %v446 = vunpack.c.l.b16 %v409
    %v447 = vunpack.c.l.b16 %v410
    %v448 = vunpack.c.l.b16 %v411
    %v449 = vunpack.c.l.b16 %v412
    %v450 = vunpack.c.l.b16 %v413
    %v451 = vunpack.c.l.b16 %v414
    %v452 = vunpack.c.l.b16 %v415
    %v453 = vunpack.c.l.b16 %v416
    %v454 = vpack.c.b16 %v439, %v438
    %v455 = vpack.c.b16 %v441, %v440
    %v456 = vpack.c.b16 %v443, %v442
    %v457 = vpack.c.b16 %v445, %v444
    %v458 = vpack.c.b16 %v447, %v446
    %v459 = vpack.c.b16 %v449, %v448
    %v460 = vpack.c.b16 %v451, %v450
    %v461 = vpack.c.b16 %v453, %v452
    %470 = vmatprep.subr.bf16.mxu0 0
    %471 = vmatpush1.bf16.msra.mxu0 %v461
    %472 = vmatprep.subr.bf16.mxu0 0
    %473 = vmatpush1.bf16.msra.mxu0 %v460
    %474 = vmatprep.subr.bf16.mxu0 0
    %475 = vmatpush1.bf16.msra.mxu0 %v459
    %476 = vmatprep.subr.bf16.mxu0 0
    %477 = vmatpush1.bf16.msra.mxu0 %v458
    %478 = vmatprep.subr.bf16.mxu0 0
    %479 = vmatpush1.bf16.msra.mxu0 %v457
    %480 = vmatprep.subr.bf16.mxu0 0
    %481 = vmatpush1.bf16.msra.mxu0 %v456
    %482 = vmatprep.subr.bf16.mxu0 0
    %483 = vmatpush1.bf16.msra.mxu0 %v455
    %484 = vmatprep.subr.bf16.mxu0 0
    %485 = vmatpush1.bf16.msra.mxu0 %v454
    %486 = vmatprep.subr.bf16.mxu0 0
    %487 = vmatpush2.bf16.msra.mxu0 0
    %488 = vmatprep.subr.bf16.mxu0 0
    %489 = vmatpush2.bf16.msra.mxu0 0
    %490 = vmatprep.subr.bf16.mxu0 0
    %491 = vmatpush2.bf16.msra.mxu0 0
    %492 = vmatprep.subr.bf16.mxu0 0
    %493 = vmatpush2.bf16.msra.mxu0 0
    %494 = vmatprep.subr.bf16.mxu0 0
    %495 = vmatpush2.bf16.msra.mxu0 0
    %496 = vmatprep.subr.bf16.mxu0 0
    %497 = vmatpush2.bf16.msra.mxu0 0
    %498 = vmatprep.subr.bf16.mxu0 0
    %499 = vmatpush2.bf16.msra.mxu0 0
    %500 = vmatprep.subr.bf16.mxu0 0
    %501 = vmatpush2.bf16.msra.mxu0 0
    %502 = vmatprep.mubr.bf16.mxu0 0
    %503 = vmatmul.mubr.bf16.gmra.mxu0 %v417
    %v504 = vpop.f32.mrf.mxu0
    %v505 = vadd.f32 %v421, %v504
    %v506 = vpop.f32.mrf.mxu0
    %v507 = vpop.f32.mrf.mxu0
    %v508 = vadd.f32 %v421, %v507
    %v509 = vpop.f32.mrf.mxu0
    %510 = vdwg.mxu0
    %vm511 = vcmask 130048
    %512 = vst.msk [vmem:[#allocation8] sm:$0xff] %vm511, %v505
    %513 = vst.msk [vmem:[#allocation8 + $0x8] sm:$0xff] %vm511, %v508
    // Predicated region
    $region26: #{tpu_custom_call.1} parent=1 // pred_check
      _
    $region27: #{tpu_custom_call.1} parent=1 // pred_check_branch
      %515 = sbr.rel (0) target = $region29
    $region28: #{tpu_custom_call.1} parent=1 // pred_region
      %s517 = ssub.s32 256, 256
      %518 = vsyncadd [#allocation4], %s517
      %s519 = sshll.u32 [#allocation8], 4
      %s520 = int_to_ptr.vmem [resolvable:$true] %s519
      %525 = dma.vmem_to_hbm [thread:$0]  %s520, 256, %s3, [#allocation4], 128, 128, 8
    $region29: #{tpu_custom_call.1} parent=1 // pred_fallthru
      _
    // Predicated region
    $region30: #{tpu_custom_call.1} parent=1 // pred_check
      _
    $region31: #{tpu_custom_call.1} parent=1 // pred_check_branch
      %527 = sbr.rel (0) target = $region33
    $region32: #{tpu_custom_call.1} parent=1 // pred_region
      %528 = dma.done [#allocation4], 256
    $region33: #{tpu_custom_call.1} parent=1 // pred_fallthru
      _
    %529 = vsyncpa [#allocation3], 1
    %530 = vsyncpa [#allocation6], 1
    %531 = vsyncpa [#allocation4], 1

</llo_original>
